<compile_context>
chip_gen: v6e
topology: v6e:2x2x1
jax: 0.10.0
libtpu: 0.0.40
codegen_flags: <defaults>
</compile_context>

<pallas_src>
import functools

import jax
import jax.numpy as jnp
from jax.experimental import pallas as pl
from jax.experimental.pallas import tpu as pltpu


def _round_up(x, m):
    return ((x + m - 1) // m) * m


def _layernorm(h, gamma, beta, eps=1e-5):
    mu = jnp.mean(h, axis=-1, keepdims=True)
    var = jnp.mean((h - mu) ** 2, axis=-1, keepdims=True)
    inv = jax.lax.rsqrt(var + eps)
    return (h - mu) * (inv * gamma) + beta


def qnet_kernel(x_ref, w1_ref, w2_ref, w3_ref, ln_ref, b3_ref, o_ref):
    x = x_ref[...]                                  # (TILE_B, in_dim) bf16
    ln = ln_ref[...].astype(jnp.float32)            # (6, H): b1,g1,be1,b2,g2,be2
    b1, g1, be1 = ln[0:1, :], ln[1:2, :], ln[2:3, :]
    b2, g2, be2 = ln[3:4, :], ln[4:5, :], ln[5:6, :]

    # Linear 1 (bf16 operands, f32 accumulation) + LayerNorm + ReLU
    h = jnp.dot(x, w1_ref[...], preferred_element_type=jnp.float32) + b1
    h = jnp.maximum(_layernorm(h, g1, be1), 0.0)
    # TODO(synk): Dropout(0.1) omitted (inference semantics); add
    # pltpu.prng_seed/prng_random_bits masking for training mode.

    # Linear 2 + LayerNorm + ReLU
    h = jnp.dot(h.astype(jnp.bfloat16), w2_ref[...],
                preferred_element_type=jnp.float32) + b2
    h = jnp.maximum(_layernorm(h, g2, be2), 0.0)

    # Output linear into a lane-dense (128-padded) block.
    o_ref[...] = (jnp.dot(h.astype(jnp.bfloat16), w3_ref[...],
                          preferred_element_type=jnp.float32)
                  + b3_ref[...].astype(jnp.float32)).astype(o_ref.dtype)


def _xavier_uniform(key, fan_in, fan_out, dtype=jnp.float32):
    limit = (6.0 / (fan_in + fan_out)) ** 0.5
    return jax.random.uniform(key, (fan_in, fan_out), dtype, -limit, limit)


def init_params(key, input_dim, output_dim, hidden_size=64):
    k1, k2, k3 = jax.random.split(key, 3)
    return dict(
        w1=_xavier_uniform(k1, input_dim, hidden_size),
        b1=jnp.zeros((1, hidden_size), jnp.float32),
        g1=jnp.ones((1, hidden_size), jnp.float32),
        be1=jnp.zeros((1, hidden_size), jnp.float32),
        w2=_xavier_uniform(k2, hidden_size, hidden_size),
        b2=jnp.zeros((1, hidden_size), jnp.float32),
        g2=jnp.ones((1, hidden_size), jnp.float32),
        be2=jnp.zeros((1, hidden_size), jnp.float32),
        w3=_xavier_uniform(k3, hidden_size, output_dim),
        b3=jnp.zeros((1, output_dim), jnp.float32),
    )


@functools.partial(jax.jit, static_argnames=("tile_b",))
def base_qnetwork_forward(x, params, tile_b=1024):
    """Pallas forward for BaseQNetwork. Accepts (B, input_dim) or (input_dim,)."""
    squeeze = x.ndim == 1
    if squeeze:
        x = x[None, :]

    B, in_dim = x.shape
    H = params["w1"].shape[1]
    out_dim = params["w3"].shape[1]
    out_pad = _round_up(max(out_dim, 128), 128)      # lane-dense output

    # Batch tile: multiple of 8 sublanes, capped so tiles fit comfortably in
    # v7x's 64 MiB VMEM (double-buffered x + output + resident weights << limit).
    TILE_B = min(tile_b, _round_up(B, 8))
    B_pad = _round_up(B, TILE_B)
    if B_pad != B:
        x = jnp.pad(x, ((0, B_pad - B), (0, 0)))

    # bf16 operands for the MXU (f32 accumulation inside the kernel).
    x_bf = x.astype(jnp.bfloat16)
    w1 = params["w1"].astype(jnp.bfloat16)
    w2 = params["w2"].astype(jnp.bfloat16)
    w3 = jnp.zeros((H, out_pad), jnp.bfloat16).at[:, :out_dim].set(
        params["w3"].astype(jnp.bfloat16))
    b3 = jnp.zeros((1, out_pad), jnp.float32).at[:, :out_dim].set(params["b3"])
    # Pack the six small per-layer vectors into a single (6, H) ref.
    ln_pack = jnp.concatenate(
        [params["b1"], params["g1"], params["be1"],
         params["b2"], params["g2"], params["be2"]], axis=0)

    grid = (pl.cdiv(B_pad, TILE_B),)
    out = pl.pallas_call(
        qnet_kernel,
        out_shape=jax.ShapeDtypeStruct((B_pad, out_pad), jnp.float32),
        grid=grid,
        in_specs=[
            pl.BlockSpec((TILE_B, in_dim), lambda i: (i, 0)),   # x: tiled over batch
            pl.BlockSpec((in_dim, H), lambda i: (0, 0)),        # w1: resident
            pl.BlockSpec((H, H), lambda i: (0, 0)),             # w2: resident
            pl.BlockSpec((H, out_pad), lambda i: (0, 0)),       # w3 (padded): resident
            pl.BlockSpec((6, H), lambda i: (0, 0)),             # packed LN/bias vectors
            pl.BlockSpec((1, out_pad), lambda i: (0, 0)),       # b3 (padded)
        ],
        out_specs=pl.BlockSpec((TILE_B, out_pad), lambda i: (i, 0)),
        compiler_params=pltpu.CompilerParams(
            dimension_semantics=("parallel",),
            vmem_limit_bytes=64 * 1024 * 1024,
        ),
    )(x_bf, w1, w2, w3, ln_pack, b3)

    out = out[:B, :out_dim]
    if squeeze:
        out = out[0]
    return out


def _reference(x, p):
    """Pure-JAX reference mirroring the kernel's bf16-operand / f32-accumulate math."""
    def ln(h, g, b):
        mu = jnp.mean(h, axis=-1, keepdims=True)
        var = jnp.mean((h - mu) ** 2, axis=-1, keepdims=True)
        return (h - mu) * (jax.lax.rsqrt(var + 1e-5) * g) + b

    h = jnp.dot(x.astype(jnp.bfloat16), p["w1"].astype(jnp.bfloat16),
                preferred_element_type=jnp.float32) + p["b1"]
    h = jnp.maximum(ln(h, p["g1"], p["be1"]), 0.0)
    h = jnp.dot(h.astype(jnp.bfloat16), p["w2"].astype(jnp.bfloat16),
                preferred_element_type=jnp.float32) + p["b2"]
    h = jnp.maximum(ln(h, p["g2"], p["be2"]), 0.0)
    return jnp.dot(h.astype(jnp.bfloat16), p["w3"].astype(jnp.bfloat16),
                   preferred_element_type=jnp.float32) + p["b3"]


if __name__ == "__main__":
    key = jax.random.PRNGKey(0)
    kx, kp = jax.random.split(key)

    batch, input_dim, hidden, output_dim = 2, 8, 64, 4
    x = jax.random.normal(kx, (batch, input_dim), jnp.float32)
    params = init_params(kp, input_dim, output_dim, hidden)

    out = base_qnetwork_forward(x, params)
    jax.block_until_ready(out)
    assert out.shape == (batch, output_dim)

    ref = _reference(x, params)
    assert jnp.allclose(out, ref, atol=5e-3, rtol=5e-3), (
        f"max abs diff {jnp.max(jnp.abs(out - ref))}")

    # 1-D input path (matches torch's unsqueeze/squeeze)
    out1d = base_qnetwork_forward(x[0], params)
    jax.block_until_ready(out1d)
    assert out1d.shape == (output_dim,)
    assert jnp.allclose(out1d, ref[0], atol=5e-3, rtol=5e-3)

    print("KERNEL_OK")
</pallas_src>

<mosaic_0001>
module attributes {stable_mosaic.version = 11 : i64} {
  func.func @qnet_kernel(%arg0: i32, %arg1: memref<8x8xbf16, #tpu.memory_space<vmem>>, %arg2: memref<8x64xbf16, #tpu.memory_space<vmem>>, %arg3: memref<64x64xbf16, #tpu.memory_space<vmem>>, %arg4: memref<64x128xbf16, #tpu.memory_space<vmem>>, %arg5: memref<6x64xf32, #tpu.memory_space<vmem>>, %arg6: memref<1x128xf32, #tpu.memory_space<vmem>>, %arg7: memref<8x128xf32, #tpu.memory_space<vmem>>) attributes {dimension_semantics = [#tpu.dimension_semantics<parallel>], iteration_bounds = array<i64: 1>, scalar_prefetch = 0 : i64, scratch_operands = 0 : i64, tpu.core_type = #tpu.core_type<tc>, window_params = [{transform_indices = @transform_0, window_bounds = array<i64: 8, 8>}, {pipeline_mode = #tpu.pipeline_mode<synchronous>, transform_indices = @transform_1, window_bounds = array<i64: 8, 64>}, {pipeline_mode = #tpu.pipeline_mode<synchronous>, transform_indices = @transform_2, window_bounds = array<i64: 64, 64>}, {pipeline_mode = #tpu.pipeline_mode<synchronous>, transform_indices = @transform_3, window_bounds = array<i64: 64, 128>}, {pipeline_mode = #tpu.pipeline_mode<synchronous>, transform_indices = @transform_4, window_bounds = array<i64: 6, 64>}, {pipeline_mode = #tpu.pipeline_mode<synchronous>, transform_indices = @transform_5, window_bounds = array<i64: 1, 128>}, {transform_indices = @transform_6, window_bounds = array<i64: 8, 128>}]} {
    %c0 = arith.constant 0 : index
    %c0_0 = arith.constant 0 : index
    %0 = vector.load %arg1[%c0, %c0_0] : memref<8x8xbf16, #tpu.memory_space<vmem>>, vector<8x8xbf16>
    %c0_1 = arith.constant 0 : index
    %c0_2 = arith.constant 0 : index
    %1 = vector.load %arg5[%c0_1, %c0_2] : memref<6x64xf32, #tpu.memory_space<vmem>>, vector<6x64xf32>
    %2 = vector.extract_strided_slice %1 {offsets = [0, 0], sizes = [1, 64], strides = [1, 1]} : vector<6x64xf32> to vector<1x64xf32>
    %3 = vector.extract_strided_slice %1 {offsets = [1, 0], sizes = [1, 64], strides = [1, 1]} : vector<6x64xf32> to vector<1x64xf32>
    %4 = vector.extract_strided_slice %1 {offsets = [2, 0], sizes = [1, 64], strides = [1, 1]} : vector<6x64xf32> to vector<1x64xf32>
    %5 = vector.extract_strided_slice %1 {offsets = [3, 0], sizes = [1, 64], strides = [1, 1]} : vector<6x64xf32> to vector<1x64xf32>
    %6 = vector.extract_strided_slice %1 {offsets = [4, 0], sizes = [1, 64], strides = [1, 1]} : vector<6x64xf32> to vector<1x64xf32>
    %7 = vector.extract_strided_slice %1 {offsets = [5, 0], sizes = [1, 64], strides = [1, 1]} : vector<6x64xf32> to vector<1x64xf32>
    %c0_3 = arith.constant 0 : index
    %c0_4 = arith.constant 0 : index
    %8 = vector.load %arg2[%c0_3, %c0_4] : memref<8x64xbf16, #tpu.memory_space<vmem>>, vector<8x64xbf16>
    %cst = arith.constant dense<0.000000e+00> : vector<8x64xf32>
    %9 = tpu.matmul %0, %8, %cst {dimension_numbers = #tpu.dot_dimension_numbers<[1], [0], [0], [1], [0, 0, 1, 1], [], []>} : vector<8x8xbf16>, vector<8x64xbf16>, vector<8x64xf32> -> vector<8x64xf32>
    %10 = vector.broadcast %2 : vector<1x64xf32> to vector<8x64xf32>
    %11 = arith.addf %9, %10 : vector<8x64xf32>
    %cst_5 = arith.constant dense<0.000000e+00> : vector<8xf32>
    %12 = vector.multi_reduction <add>, %11, %cst_5 [1] : vector<8x64xf32> to vector<8xf32>
    %13 = vector.shape_cast %12 : vector<8xf32> to vector<8x1xf32>
    %cst_6 = arith.constant 6.400000e+01 : f32
    %14 = vector.broadcast %cst_6 : f32 to vector<8x1xf32>
    %15 = arith.divf %13, %14 : vector<8x1xf32>
    %16 = vector.broadcast %15 : vector<8x1xf32> to vector<8x64xf32>
    %17 = arith.subf %11, %16 : vector<8x64xf32>
    %18 = arith.mulf %17, %17 : vector<8x64xf32>
    %cst_7 = arith.constant dense<0.000000e+00> : vector<8xf32>
    %19 = vector.multi_reduction <add>, %18, %cst_7 [1] : vector<8x64xf32> to vector<8xf32>
    %20 = vector.shape_cast %19 : vector<8xf32> to vector<8x1xf32>
    %cst_8 = arith.constant 6.400000e+01 : f32
    %21 = vector.broadcast %cst_8 : f32 to vector<8x1xf32>
    %22 = arith.divf %20, %21 : vector<8x1xf32>
    %cst_9 = arith.constant 9.99999974E-6 : f32
    %23 = vector.broadcast %cst_9 : f32 to vector<8x1xf32>
    %24 = arith.addf %22, %23 : vector<8x1xf32>
    %25 = math.rsqrt %24 : vector<8x1xf32>
    %26 = vector.broadcast %15 : vector<8x1xf32> to vector<8x64xf32>
    %27 = arith.subf %11, %26 : vector<8x64xf32>
    %28 = vector.broadcast %25 : vector<8x1xf32> to vector<8x64xf32>
    %29 = vector.broadcast %3 : vector<1x64xf32> to vector<8x64xf32>
    %30 = arith.mulf %28, %29 : vector<8x64xf32>
    %31 = arith.mulf %27, %30 : vector<8x64xf32>
    %32 = vector.broadcast %4 : vector<1x64xf32> to vector<8x64xf32>
    %33 = arith.addf %31, %32 : vector<8x64xf32>
    %cst_10 = arith.constant 0.000000e+00 : f32
    %34 = vector.broadcast %cst_10 : f32 to vector<8x64xf32>
    %35 = arith.maximumf %33, %34 : vector<8x64xf32>
    %36 = arith.truncf %35 : vector<8x64xf32> to vector<8x64xbf16>
    %c0_11 = arith.constant 0 : index
    %c0_12 = arith.constant 0 : index
    %37 = vector.load %arg3[%c0_11, %c0_12] : memref<64x64xbf16, #tpu.memory_space<vmem>>, vector<64x64xbf16>
    %cst_13 = arith.constant dense<0.000000e+00> : vector<8x64xf32>
    %38 = tpu.matmul %36, %37, %cst_13 {dimension_numbers = #tpu.dot_dimension_numbers<[1], [0], [0], [1], [0, 0, 1, 1], [], []>} : vector<8x64xbf16>, vector<64x64xbf16>, vector<8x64xf32> -> vector<8x64xf32>
    %39 = vector.broadcast %5 : vector<1x64xf32> to vector<8x64xf32>
    %40 = arith.addf %38, %39 : vector<8x64xf32>
    %cst_14 = arith.constant dense<0.000000e+00> : vector<8xf32>
    %41 = vector.multi_reduction <add>, %40, %cst_14 [1] : vector<8x64xf32> to vector<8xf32>
    %42 = vector.shape_cast %41 : vector<8xf32> to vector<8x1xf32>
    %cst_15 = arith.constant 6.400000e+01 : f32
    %43 = vector.broadcast %cst_15 : f32 to vector<8x1xf32>
    %44 = arith.divf %42, %43 : vector<8x1xf32>
    %45 = vector.broadcast %44 : vector<8x1xf32> to vector<8x64xf32>
    %46 = arith.subf %40, %45 : vector<8x64xf32>
    %47 = arith.mulf %46, %46 : vector<8x64xf32>
    %cst_16 = arith.constant dense<0.000000e+00> : vector<8xf32>
    %48 = vector.multi_reduction <add>, %47, %cst_16 [1] : vector<8x64xf32> to vector<8xf32>
    %49 = vector.shape_cast %48 : vector<8xf32> to vector<8x1xf32>
    %cst_17 = arith.constant 6.400000e+01 : f32
    %50 = vector.broadcast %cst_17 : f32 to vector<8x1xf32>
    %51 = arith.divf %49, %50 : vector<8x1xf32>
    %cst_18 = arith.constant 9.99999974E-6 : f32
    %52 = vector.broadcast %cst_18 : f32 to vector<8x1xf32>
    %53 = arith.addf %51, %52 : vector<8x1xf32>
    %54 = math.rsqrt %53 : vector<8x1xf32>
    %55 = vector.broadcast %44 : vector<8x1xf32> to vector<8x64xf32>
    %56 = arith.subf %40, %55 : vector<8x64xf32>
    %57 = vector.broadcast %54 : vector<8x1xf32> to vector<8x64xf32>
    %58 = vector.broadcast %6 : vector<1x64xf32> to vector<8x64xf32>
    %59 = arith.mulf %57, %58 : vector<8x64xf32>
    %60 = arith.mulf %56, %59 : vector<8x64xf32>
    %61 = vector.broadcast %7 : vector<1x64xf32> to vector<8x64xf32>
    %62 = arith.addf %60, %61 : vector<8x64xf32>
    %cst_19 = arith.constant 0.000000e+00 : f32
    %63 = vector.broadcast %cst_19 : f32 to vector<8x64xf32>
    %64 = arith.maximumf %62, %63 : vector<8x64xf32>
    %65 = arith.truncf %64 : vector<8x64xf32> to vector<8x64xbf16>
    %c0_20 = arith.constant 0 : index
    %c0_21 = arith.constant 0 : index
    %66 = vector.load %arg4[%c0_20, %c0_21] : memref<64x128xbf16, #tpu.memory_space<vmem>>, vector<64x128xbf16>
    %cst_22 = arith.constant dense<0.000000e+00> : vector<8x128xf32>
    %67 = tpu.matmul %65, %66, %cst_22 {dimension_numbers = #tpu.dot_dimension_numbers<[1], [0], [0], [1], [0, 0, 1, 1], [], []>} : vector<8x64xbf16>, vector<64x128xbf16>, vector<8x128xf32> -> vector<8x128xf32>
    %c0_23 = arith.constant 0 : index
    %c0_24 = arith.constant 0 : index
    %68 = vector.load %arg6[%c0_23, %c0_24] : memref<1x128xf32, #tpu.memory_space<vmem>>, vector<1x128xf32>
    %69 = vector.broadcast %68 : vector<1x128xf32> to vector<8x128xf32>
    %70 = arith.addf %67, %69 : vector<8x128xf32>
    %c0_25 = arith.constant 0 : index
    %c0_26 = arith.constant 0 : index
    %71 = vector.load %arg7[%c0_25, %c0_26] : memref<8x128xf32, #tpu.memory_space<vmem>>, vector<8x128xf32>
    tpu.vector_store %arg7[%c0_25, %c0_26], %70 {strides = array<i32>} : memref<8x128xf32, #tpu.memory_space<vmem>>, vector<8x128xf32>,
    return
  }
  func.func @transform_0(%arg0: i32) -> (i32, i32) {
    %c0_i32 = arith.constant 0 : i32
    %c0_i32_0 = arith.constant 0 : i32
    return %arg0, %c0_i32 : i32, i32
  }
  func.func @transform_1(%arg0: i32) -> (i32, i32) {
    %c0_i32 = arith.constant 0 : i32
    %c0_i32_0 = arith.constant 0 : i32
    %c0_i32_1 = arith.constant 0 : i32
    return %c0_i32, %c0_i32_0 : i32, i32
  }
  func.func @transform_2(%arg0: i32) -> (i32, i32) {
    %c0_i32 = arith.constant 0 : i32
    %c0_i32_0 = arith.constant 0 : i32
    %c0_i32_1 = arith.constant 0 : i32
    return %c0_i32, %c0_i32_0 : i32, i32
  }
  func.func @transform_3(%arg0: i32) -> (i32, i32) {
    %c0_i32 = arith.constant 0 : i32
    %c0_i32_0 = arith.constant 0 : i32
    %c0_i32_1 = arith.constant 0 : i32
    return %c0_i32, %c0_i32_0 : i32, i32
  }
  func.func @transform_4(%arg0: i32) -> (i32, i32) {
    %c0_i32 = arith.constant 0 : i32
    %c0_i32_0 = arith.constant 0 : i32
    %c0_i32_1 = arith.constant 0 : i32
    return %c0_i32, %c0_i32_0 : i32, i32
  }
  func.func @transform_5(%arg0: i32) -> (i32, i32) {
    %c0_i32 = arith.constant 0 : i32
    %c0_i32_0 = arith.constant 0 : i32
    %c0_i32_1 = arith.constant 0 : i32
    return %c0_i32, %c0_i32_0 : i32, i32
  }
  func.func @transform_6(%arg0: i32) -> (i32, i32) {
    %c0_i32 = arith.constant 0 : i32
    %c0_i32_0 = arith.constant 0 : i32
    return %arg0, %c0_i32 : i32, i32
  }
}

</mosaic_0001>

<llo_original>
// kernel: base_qnetwork_forward.1
$region0: #{base_qnetwork_forward.1}
  #allocation0 [shape = 'u32[]', space=smem, size = 0x4, offset = 0x4, fixed_abs, tag = 'smem constant byte address 0x4 - core index']
  #allocation1 [shape = 'u32[144,128]{1,0:T(1,128)}', space=vmem, size = 0x12000, scoped, tag = 'internal scratch']
  %s0 = inlined_call_operand.vmem [shape: bf16[8,8], index: 0, kind: input, shape index: {}]
  %s1 = inlined_call_operand.vmem [shape: bf16[8,64], index: 1, kind: input, shape index: {}]
  %s2 = inlined_call_operand.vmem [shape: bf16[64,64], index: 2, kind: input, shape index: {}]
  %s3 = inlined_call_operand.vmem [shape: bf16[64,128], index: 3, kind: input, shape index: {}]
  %s4 = inlined_call_operand.vmem [shape: f32[6,64], index: 4, kind: input, shape index: {}]
  %s5 = inlined_call_operand.vmem [shape: f32[1,128], index: 5, kind: input, shape index: {}]
  %s6 = inlined_call_operand.vmem [shape: f32[8,128], index: 6, kind: output, shape index: {}]
  %s7 = sld [smem:[#allocation0]]
  $region34: #{base_qnetwork_forward.1} parent=0
    _
  %s9 = ssub.s32 1, %s7
  %s10 = scalar_select 0, %s9, %s7
  // Predicated region
  $region2: #{base_qnetwork_forward.1} parent=0 // pred_check
    _
  $region3: #{base_qnetwork_forward.1} parent=0 // pred_check_branch
    %12 = sbr.rel (0) target = $region5
  $region4: #{base_qnetwork_forward.1} parent=0 // pred_region
    _
  $region5: #{base_qnetwork_forward.1} parent=0 // pred_fallthru
    _
  // Predicated region
  $region6: #{base_qnetwork_forward.1} parent=0 // pred_check
    _
  $region7: #{base_qnetwork_forward.1} parent=0 // pred_check_branch
    %14 = sbr.rel (0) target = $region9
  $region8: #{base_qnetwork_forward.1} parent=0 // pred_region
    _
  $region9: #{base_qnetwork_forward.1} parent=0 // pred_fallthru
    _
  // Predicated region
  $region10: #{base_qnetwork_forward.1} parent=0 // pred_check
    _
  $region11: #{base_qnetwork_forward.1} parent=0 // pred_check_branch
    %16 = sbr.rel (0) target = $region13
  $region12: #{base_qnetwork_forward.1} parent=0 // pred_region
    _
  $region13: #{base_qnetwork_forward.1} parent=0 // pred_fallthru
    _
  // Predicated region
  $region14: #{base_qnetwork_forward.1} parent=0 // pred_check
    _
  $region15: #{base_qnetwork_forward.1} parent=0 // pred_check_branch
    %18 = sbr.rel (0) target = $region17
  $region16: #{base_qnetwork_forward.1} parent=0 // pred_region
    _
  $region17: #{base_qnetwork_forward.1} parent=0 // pred_fallthru
    _
  // Predicated region
  $region18: #{base_qnetwork_forward.1} parent=0 // pred_check
    _
  $region19: #{base_qnetwork_forward.1} parent=0 // pred_check_branch
    %20 = sbr.rel (0) target = $region21
  $region20: #{base_qnetwork_forward.1} parent=0 // pred_region
    _
  $region21: #{base_qnetwork_forward.1} parent=0 // pred_fallthru
    _
  // Predicated region
  $region22: #{base_qnetwork_forward.1} parent=0 // pred_check
    _
  $region23: #{base_qnetwork_forward.1} parent=0 // pred_check_branch
    %22 = sbr.rel (0) target = $region25
  $region24: #{base_qnetwork_forward.1} parent=0 // pred_region
    _
  $region25: #{base_qnetwork_forward.1} parent=0 // pred_fallthru
    _
  %v24 = vld [vmem:[%s0] sm:$0xf]
  %v25 = vld [vmem:[%s4] sm:$0x3f]
  %v26 = vld [vmem:[%s1] sm:$0xf]
  %v27 = vlaneseq
  %v28 = vshrl.u32 %v27, 7
  %v29 = vsub.s32 0, %v28
  %v30 = vrot.slane %v25, %v29
  %vm31 = vcmask 64512
  %v33 = vsel %vm31, %v24, 0
  %vm35 = vcmask 1043456
  %v37 = vsel %vm35, %v26, 0
  %39 = vmatprep.subr.bf16.mxu0 0
  %40 = vmatpush1.bf16.msra.mxu0 0
  %41 = vmatprep.subr.bf16.mxu0 0
  %42 = vmatpush1.bf16.msra.mxu0 0
  %43 = vmatprep.subr.bf16.mxu0 0
  %44 = vmatpush1.bf16.msra.mxu0 0
  %45 = vmatprep.subr.bf16.mxu0 0
  %46 = vmatpush1.bf16.msra.mxu0 0
  %47 = vmatprep.subr.bf16.mxu0 0
  %48 = vmatpush1.bf16.msra.mxu0 0
  %49 = vmatprep.subr.bf16.mxu0 0
  %50 = vmatpush1.bf16.msra.mxu0 0
  %51 = vmatprep.subr.bf16.mxu0 0
  %52 = vmatpush1.bf16.msra.mxu0 0
  %53 = vmatprep.subr.bf16.mxu0 0
  %54 = vmatpush1.bf16.msra.mxu0 %v37
  %55 = vmatprep.subr.bf16.mxu0 0
  %56 = vmatpush2.bf16.msra.mxu0 0
  %57 = vmatprep.subr.bf16.mxu0 0
  %58 = vmatpush2.bf16.msra.mxu0 0
  %59 = vmatprep.subr.bf16.mxu0 0
  %60 = vmatpush2.bf16.msra.mxu0 0
  %61 = vmatprep.subr.bf16.mxu0 0
  %62 = vmatpush2.bf16.msra.mxu0 0
  %63 = vmatprep.subr.bf16.mxu0 0
  %64 = vmatpush2.bf16.msra.mxu0 0
  %65 = vmatprep.subr.bf16.mxu0 0
  %66 = vmatpush2.bf16.msra.mxu0 0
  %67 = vmatprep.subr.bf16.mxu0 0
  %68 = vmatpush2.bf16.msra.mxu0 0
  %69 = vmatprep.subr.bf16.mxu0 0
  %70 = vmatpush2.bf16.msra.mxu0 0
  %71 = vmatprep.mubr.bf16.mxu0 0
  %72 = vmatmul.mubr.bf16.gmra.mxu0 %v33
  %v73 = vpop.f32.mrf.mxu0
  %v74 = vadd.f32 %v30, %v73
  %v75 = vpop.f32.mrf.mxu0
  %v76 = vpop.f32.mrf.mxu0
  %v77 = vpop.f32.mrf.mxu0
  %78 = vdwg.mxu0
  %vm79 = vcmask 523264
  %v80 = vsel %vm79, %v74, 0.0
  %81 = vadd.xlane.f32.xlu0 %v80
  %v82 = vpop.xlane.xlu0 %81
  %v83 = vrcp.pop 64.0
  %v84 = vmul.f32 %v82, %v83
  %v85 = vsub.f32 %v74, %v84
  %v86 = vmul.f32 %v85, %v85
  %v87 = vsel %vm79, %v86, 0.0
  %88 = vadd.xlane.f32.xlu0 %v87
  %v89 = vpop.xlane.xlu0 %88
  %v90 = vmul.f32 %v89, %v83
  %v91 = vadd.f32 %v90, 1e-05
  %v92 = vrsqrt.pop %v91
  %v93 = vlaneseq
  %v94 = vshrl.u32 %v93, 7
  %v95 = vsub.s32 1, %v94
  %v96 = vrot.slane %v25, %v95
  %v97 = vmul.f32 %v92, %v96
  %v98 = vmul.f32 %v85, %v97
  %v99 = vlaneseq
  %v100 = vshrl.u32 %v99, 7
  %v101 = vsub.s32 2, %v100
  %v102 = vrot.slane %v25, %v101
  %v103 = vadd.f32 %v98, %v102
  %v104 = vmax.f32 %v103, 0.0
  %v105 = vpack.c.bf16 %v104, %v104
  %v106 = vld [vmem:[%s2] sm:$0xf]
  %v107 = vld [vmem:[%s2 + $0x4] sm:$0xf]
  %v108 = vld [vmem:[%s2 + $0x8] sm:$0xf]
  %v109 = vld [vmem:[%s2 + $0xc] sm:$0xf]
  %v110 = vld [vmem:[%s2 + $0x10] sm:$0xf]
  %v111 = vld [vmem:[%s2 + $0x14] sm:$0xf]
  %v112 = vld [vmem:[%s2 + $0x18] sm:$0xf]
  %v113 = vld [vmem:[%s2 + $0x1c] sm:$0xf]
  %v114 = vlaneseq
  %v115 = vshrl.u32 %v114, 7
  %v116 = vsub.s32 3, %v115
  %v117 = vrot.slane %v25, %v116
  %v126 = vunpack.c.l.b16 %v106
  %v127 = vunpack.c.l.b16 %v107
  %v128 = vunpack.c.l.b16 %v108
  %v129 = vunpack.c.l.b16 %v109
  %v130 = vunpack.c.l.b16 %v110
  %v131 = vunpack.c.l.b16 %v111
  %v132 = vunpack.c.l.b16 %v112
  %v133 = vunpack.c.l.b16 %v113
  %v134 = vpack.c.b16 %v127, %v126
  %v135 = vpack.c.b16 %v129, %v128
  %v136 = vpack.c.b16 %v131, %v130
  %v137 = vpack.c.b16 %v133, %v132
  %v143 = vsel %vm79, %v105, 0
  %145 = vmatprep.subr.bf16.mxu0 0
  %146 = vmatpush1.bf16.msra.mxu0 0
  %147 = vmatprep.subr.bf16.mxu0 0
  %148 = vmatpush1.bf16.msra.mxu0 0
  %149 = vmatprep.subr.bf16.mxu0 0
  %150 = vmatpush1.bf16.msra.mxu0 0
  %151 = vmatprep.subr.bf16.mxu0 0
  %152 = vmatpush1.bf16.msra.mxu0 0
  %153 = vmatprep.subr.bf16.mxu0 0
  %154 = vmatpush1.bf16.msra.mxu0 %v137
  %155 = vmatprep.subr.bf16.mxu0 0
  %156 = vmatpush1.bf16.msra.mxu0 %v136
  %157 = vmatprep.subr.bf16.mxu0 0
  %158 = vmatpush1.bf16.msra.mxu0 %v135
  %159 = vmatprep.subr.bf16.mxu0 0
  %160 = vmatpush1.bf16.msra.mxu0 %v134
  %161 = vmatprep.subr.bf16.mxu0 0
  %162 = vmatpush2.bf16.msra.mxu0 0
  %163 = vmatprep.subr.bf16.mxu0 0
  %164 = vmatpush2.bf16.msra.mxu0 0
  %165 = vmatprep.subr.bf16.mxu0 0
  %166 = vmatpush2.bf16.msra.mxu0 0
  %167 = vmatprep.subr.bf16.mxu0 0
  %168 = vmatpush2.bf16.msra.mxu0 0
  %169 = vmatprep.subr.bf16.mxu0 0
  %170 = vmatpush2.bf16.msra.mxu0 0
  %171 = vmatprep.subr.bf16.mxu0 0
  %172 = vmatpush2.bf16.msra.mxu0 0
  %173 = vmatprep.subr.bf16.mxu0 0
  %174 = vmatpush2.bf16.msra.mxu0 0
  %175 = vmatprep.subr.bf16.mxu0 0
  %176 = vmatpush2.bf16.msra.mxu0 0
  %177 = vmatprep.mubr.bf16.mxu0 0
  %178 = vmatmul.mubr.bf16.gmra.mxu0 %v143
  %v179 = vpop.f32.mrf.mxu0
  %v180 = vadd.f32 %v117, %v179
  %v181 = vpop.f32.mrf.mxu0
  %v182 = vpop.f32.mrf.mxu0
  %v183 = vpop.f32.mrf.mxu0
  %184 = vdwg.mxu0
  %v185 = vsel %vm79, %v180, 0.0
  %186 = vadd.xlane.f32.xlu0 %v185
  %v187 = vpop.xlane.xlu0 %186
  %v188 = vmul.f32 %v187, %v83
  %v189 = vsub.f32 %v180, %v188
  %v190 = vmul.f32 %v189, %v189
  %v191 = vsel %vm79, %v190, 0.0
  %192 = vadd.xlane.f32.xlu0 %v191
  %v193 = vpop.xlane.xlu0 %192
  %v194 = vmul.f32 %v193, %v83
  %v195 = vadd.f32 %v194, 1e-05
  %v196 = vrsqrt.pop %v195
  %v197 = vlaneseq
  %v198 = vshrl.u32 %v197, 7
  %v199 = vsub.s32 4, %v198
  %v200 = vrot.slane %v25, %v199
  %v201 = vmul.f32 %v196, %v200
  %v202 = vmul.f32 %v189, %v201
  %v203 = vlaneseq
  %v204 = vshrl.u32 %v203, 7
  %v205 = vsub.s32 5, %v204
  %v206 = vrot.slane %v25, %v205
  %v207 = vadd.f32 %v202, %v206
  %v208 = vmax.f32 %v207, 0.0
  %v209 = vpack.c.bf16 %v208, %v208
  %v210 = vld [vmem:[%s3] sm:$0xf]
  %v211 = vld [vmem:[%s3 + $0x4] sm:$0xf]
  %v212 = vld [vmem:[%s3 + $0x8] sm:$0xf]
  %v213 = vld [vmem:[%s3 + $0xc] sm:$0xf]
  %v214 = vld [vmem:[%s3 + $0x10] sm:$0xf]
  %v215 = vld [vmem:[%s3 + $0x14] sm:$0xf]
  %v216 = vld [vmem:[%s3 + $0x18] sm:$0xf]
  %v217 = vld [vmem:[%s3 + $0x1c] sm:$0xf]
  %v218 = vld [vmem:[%s5] sm:$0x1]
  %v220 = vlaneseq
  %v221 = vshrl.u32 %v220, 7
  %v222 = vsub.s32 0, %v221
  %v223 = vrot.slane %v218, %v222
  %v233 = vunpack.c.l.b16 %v210
  %v234 = vunpack.c.l.b16 %v211
  %v235 = vunpack.c.l.b16 %v212
  %v236 = vunpack.c.l.b16 %v213
  %v237 = vunpack.c.l.b16 %v214
  %v238 = vunpack.c.l.b16 %v215
  %v239 = vunpack.c.l.b16 %v216
  %v240 = vunpack.c.l.b16 %v217
  %v241 = vpack.c.b16 %v234, %v233
  %v242 = vpack.c.b16 %v236, %v235
  %v243 = vpack.c.b16 %v238, %v237
  %v244 = vpack.c.b16 %v240, %v239
  %v250 = vsel %vm79, %v209, 0
  %252 = vmatprep.subr.bf16.mxu0 0
  %253 = vmatpush1.bf16.msra.mxu0 0
  %254 = vmatprep.subr.bf16.mxu0 0
  %255 = vmatpush1.bf16.msra.mxu0 0
  %256 = vmatprep.subr.bf16.mxu0 0
  %257 = vmatpush1.bf16.msra.mxu0 0
  %258 = vmatprep.subr.bf16.mxu0 0
  %259 = vmatpush1.bf16.msra.mxu0 0
  %260 = vmatprep.subr.bf16.mxu0 0
  %261 = vmatpush1.bf16.msra.mxu0 %v244
  %262 = vmatprep.subr.bf16.mxu0 0
  %263 = vmatpush1.bf16.msra.mxu0 %v243
  %264 = vmatprep.subr.bf16.mxu0 0
  %265 = vmatpush1.bf16.msra.mxu0 %v242
  %266 = vmatprep.subr.bf16.mxu0 0
  %267 = vmatpush1.bf16.msra.mxu0 %v241
  %268 = vmatprep.subr.bf16.mxu0 0
  %269 = vmatpush2.bf16.msra.mxu0 0
  %270 = vmatprep.subr.bf16.mxu0 0
  %271 = vmatpush2.bf16.msra.mxu0 0
  %272 = vmatprep.subr.bf16.mxu0 0
  %273 = vmatpush2.bf16.msra.mxu0 0
  %274 = vmatprep.subr.bf16.mxu0 0
  %275 = vmatpush2.bf16.msra.mxu0 0
  %276 = vmatprep.subr.bf16.mxu0 0
  %277 = vmatpush2.bf16.msra.mxu0 0
  %278 = vmatprep.subr.bf16.mxu0 0
  %279 = vmatpush2.bf16.msra.mxu0 0
  %280 = vmatprep.subr.bf16.mxu0 0
  %281 = vmatpush2.bf16.msra.mxu0 0
  %282 = vmatprep.subr.bf16.mxu0 0
  %283 = vmatpush2.bf16.msra.mxu0 0
  %284 = vmatprep.mubr.bf16.mxu0 0
  %285 = vmatmul.mubr.bf16.gmra.mxu0 %v250
  %v286 = vpop.f32.mrf.mxu0
  %v287 = vadd.f32 %v223, %v286
  %v288 = vpop.f32.mrf.mxu0
  %v289 = vpop.f32.mrf.mxu0
  %v290 = vpop.f32.mrf.mxu0
  %291 = vdwg.mxu0
  %292 = vst [vmem:[%s6] sm:$0xff] %v287
  // Predicated region
  $region26: #{base_qnetwork_forward.1} parent=0 // pred_check
    _
  $region27: #{base_qnetwork_forward.1} parent=0 // pred_check_branch
    %294 = sbr.rel (0) target = $region29
  $region28: #{base_qnetwork_forward.1} parent=0 // pred_region
    _
  $region29: #{base_qnetwork_forward.1} parent=0 // pred_fallthru
    _
  // Predicated region
  $region30: #{base_qnetwork_forward.1} parent=0 // pred_check
    _
  $region31: #{base_qnetwork_forward.1} parent=0 // pred_check_branch
    %296 = sbr.rel (0) target = $region33
  $region32: #{base_qnetwork_forward.1} parent=0 // pred_region
    _
  $region33: #{base_qnetwork_forward.1} parent=0 // pred_fallthru
    _

</llo_original>
